<compile_context>
chip_gen: v7x
topology: tpu7x:2x2x1
jax: 0.10.0
libtpu: 0.0.40
codegen_flags: <defaults>
</compile_context>

<pallas_src>
import functools

import jax
import jax.numpy as jnp
from jax import lax
from jax.experimental import pallas as pl
from jax.experimental.pallas import tpu as pltpu

_NEG = -1e30                       # finite "minus infinity" for alignment padding
_VREG_CARRY_BUDGET = 160 * 1024    # keep loop-carried slab below this to stay vreg-resident


def _round_up(x: int, m: int) -> int:
    return (x + m - 1) // m * m


def _vmem_capacity_bytes() -> int:
    try:
        return int(pltpu.get_tpu_info().vmem_capacity_bytes)
    except Exception:
        return 64 * 1024 * 1024    # conservative: v7x per-TensorCore VMEM


def _tensorcores_per_chip() -> int:
    """2 for megacore-style chips (v4/v5p) and v7x; 1 for v2/v3/v5e/v6e; 1 if unknown."""
    try:
        kind = (jax.devices()[0].device_kind or "").lower()
    except Exception:
        return 1
    if any(t in kind for t in ("v5 lite", "v5e", "v6", "v2", "v3")):
        return 1
    if any(t in kind for t in ("v4", "v5p", "v5 p", "7")):
        return 2
    return 1


def _pick_batch_tile(B, M, N, Mp_pad, Np_pad, vmem_cap, n_cores):
    """Pick Bt (a divisor of B) and whether the slab is carried in registers.

    Per-batch-element footprint (f32, (8,128) tile-padded VMEM layout):
      input block  : 2 (double buffer) * round_up(M,8) * round_up(N,128)
      output block : 2 (double buffer) * round_up(M,8) * round_up(N,128)
      working slab : Mp_pad * Np_pad   (+2x headroom for carry / temporaries)
    """
    Ma, Na = _round_up(M, 8), _round_up(N, 128)
    per_b = 4 * (4 * Ma * Na + 3 * Mp_pad * Np_pad)
    budget = max(per_b, int(0.4 * vmem_cap))          # chip-aware VMEM budget
    slab_b = 4 * Mp_pad * Np_pad

    divisors = [d for d in range(1, B + 1) if B % d == 0]
    fits = [d for d in divisors if d * per_b <= budget] or [1]
    vreg_ok = [d for d in fits if d * slab_b <= _VREG_CARRY_BUDGET]

    carry_in_regs = bool(vreg_ok)
    if carry_in_regs:
        pool = vreg_ok
    else:
        # Slab can't be vreg-resident even for a single batch element: iterate in place
        # on the VMEM scratch; per-step overhead is negligible vs per-iteration slab
        # traffic, so keep the tile minimal.
        pool = [min(fits)]

    if n_cores >= 2 and B >= 2:
        # v7x megacore: prefer an even number of grid steps (balanced TensorCores),
        # then >=2 steps, then the largest tile.
        def pref(bt):
            steps = B // bt
            return (steps >= 2 and steps % 2 == 0, steps >= 2, bt)
        bt = max(pool, key=pref)
    else:
        # Single TensorCore (v5e / v6e): largest tile that fits -> fewest grid steps.
        bt = max(pool)
    return bt, carry_in_regs, bt * per_b


def _log_ot_kernel(x_ref, o_ref, st_ref, *, num_iter: int, Bt: int, M: int, N: int,
                   Mp_pad: int, Np_pad: int, carry_in_regs: bool):
    """One batch-tile per grid step.

    x_ref : (Bt, M, N)            raw scores
    o_ref : (Bt, M, N)            compact result (no padded slab round-trips HBM)
    st_ref: (Bt, Mp_pad, Np_pad)  VMEM working slab (built in-kernel)
    """
    # ---- build the padded working slab once ------------------------------------------
    rows = lax.broadcasted_iota(jnp.int32, (Mp_pad, Np_pad), 0)
    cols = lax.broadcasted_iota(jnp.int32, (Mp_pad, Np_pad), 1)
    # 0 on the real (M+1, N+1) region (covers the dustbin row/col), -1e30 on alignment pad.
    bg = jnp.where((rows <= M) & (cols <= N), 0.0, _NEG).astype(jnp.float32)
    st_ref[...] = jnp.broadcast_to(bg[None, :, :], (Bt, Mp_pad, Np_pad))
    st_ref[:, 0:M, 0:N] = x_ref[...].astype(jnp.float32)

    # Tiny per-axis gates (no full-slab masks / selects per iteration).
    row_keep = lax.broadcasted_iota(jnp.int32, (1, Mp_pad, 1), 1) < M   # rows 0..M-1
    col_keep = lax.broadcasted_iota(jnp.int32, (1, 1, Np_pad), 2) < N   # cols 0..N-1

    def one_iter(s):
        # Row phase: rows 0..M-1 minus logsumexp over the N+1 real columns.
        # (Alignment-pad columns hold -1e30 -> exp underflows to exactly 0.)
        m_r = jnp.max(s, axis=2, keepdims=True)
        lse_r = m_r + jnp.log(jnp.sum(jnp.exp(s - m_r), axis=2, keepdims=True))
        s = s - jnp.where(row_keep, lse_r, 0.0)
        # Column phase: cols 0..N-1 minus logsumexp over the M+1 real rows.
        m_c = jnp.max(s, axis=1, keepdims=True)
        lse_c = m_c + jnp.log(jnp.sum(jnp.exp(s - m_c), axis=1, keepdims=True))
        s = s - jnp.where(col_keep, lse_c, 0.0)
        return s

    # Full unroll for short loops, partial unroll otherwise (hides EUP/XLU FIFO latency
    # across the back-edge without full-unroll code-size blowup at num_iter ~ 100).
    unroll = True if num_iter <= 8 else 2

    if carry_in_regs:
        # Small slab: thread it through the loop so it stays in vregs.
        s = lax.fori_loop(0, num_iter, lambda _, sv: one_iter(sv), st_ref[...],
                          unroll=unroll)
        st_ref[...] = s
    else:
        # Large slab: update in place on the single VMEM ref (one read + one write per
        # iteration; no duplicated carry buffers).
        def step(_, c):
            st_ref[...] = one_iter(st_ref[...])
            return c
        lax.fori_loop(0, num_iter, step, 0, unroll=unroll)

    # One masked, compact store per grid step (drops dustbin row/col + alignment pad).
    o_ref[...] = st_ref[:, 0:M, 0:N]


def log_optimal_transport(scores: jax.Array, num_iter: int) -> jax.Array:
    """JAX/Pallas equivalent of LogOptimalTransport(num_iter)(scores); scores: (B, M, N)."""
    out_dtype = scores.dtype
    scores = scores.astype(jnp.float32)
    B, M, N = scores.shape
    Mp_pad = _round_up(M + 1, 8)      # real rows 0..M (row M = dustbin)
    Np_pad = _round_up(N + 1, 128)    # real cols 0..N (col N = dustbin)

    vmem_cap = _vmem_capacity_bytes()
    n_cores = _tensorcores_per_chip()
    Bt, carry_in_regs, est_bytes = _pick_batch_tile(B, M, N, Mp_pad, Np_pad,
                                                    vmem_cap, n_cores)
    vmem_limit = int(min(int(0.9 * vmem_cap), max(32 * 1024 * 1024, 2 * est_bytes)))

    kernel = functools.partial(
        _log_ot_kernel, num_iter=num_iter, Bt=Bt, M=M, N=N,
        Mp_pad=Mp_pad, Np_pad=Np_pad, carry_in_regs=carry_in_regs)

    out = pl.pallas_call(
        kernel,
        out_shape=jax.ShapeDtypeStruct((B, M, N), jnp.float32),
        grid_spec=pltpu.PrefetchScalarGridSpec(
            num_scalar_prefetch=0,
            grid=(B // Bt,),
            in_specs=[pl.BlockSpec((Bt, M, N), lambda b: (b, 0, 0))],
            out_specs=pl.BlockSpec((Bt, M, N), lambda b: (b, 0, 0)),
            scratch_shapes=[pltpu.VMEM((Bt, Mp_pad, Np_pad), jnp.float32)],
        ),
        compiler_params=pltpu.CompilerParams(
            dimension_semantics=("parallel",),
            vmem_limit_bytes=vmem_limit,
        ),
    )(scores)
    return out.astype(out_dtype)


def _reference(scores: jnp.ndarray, num_iter: int) -> jnp.ndarray:
    # Pure-JAX reference mirroring the PyTorch forward exactly.
    s = jnp.pad(scores.astype(jnp.float32), ((0, 0), (0, 1), (0, 1)))
    for _ in range(num_iter):
        lse_r = jax.scipy.special.logsumexp(s[:, :-1, :], axis=2, keepdims=True)
        s = jnp.concatenate([s[:, :-1, :] - lse_r, s[:, -1:, :]], axis=1)
        lse_c = jax.scipy.special.logsumexp(s[:, :, :-1], axis=1, keepdims=True)
        s = jnp.concatenate([s[:, :, :-1] - lse_c, s[:, :, -1:]], axis=2)
    return s[:, :-1, :-1]


if __name__ == "__main__":
    key = jax.random.PRNGKey(0)
    k1, k2, k3 = jax.random.split(key, 3)

    # Test 1: canonical small shape; vreg-resident carry, fully unrolled loop.
    B, M, N, it = 2, 8, 8, 5
    x = jax.random.normal(k1, (B, M, N), dtype=jnp.float32)
    out = jax.block_until_ready(log_optimal_transport(x, it))
    ref = _reference(x, it)
    assert out.shape == (B, M, N)
    assert jnp.allclose(out, ref, atol=1e-4, rtol=1e-4)

    # Test 2: unaligned M/N + batch tiling (multiple batch elements per grid step).
    B, M, N, it = 4, 5, 7, 3
    x = jax.random.normal(k2, (B, M, N), dtype=jnp.float32)
    out = jax.block_until_ready(log_optimal_transport(x, it))
    ref = _reference(x, it)
    assert out.shape == (B, M, N)
    assert jnp.allclose(out, ref, atol=1e-4, rtol=1e-4)

    # Test 3: slab too large to stay vreg-resident -> in-place VMEM iteration path,
    # num_iter > 8 -> partial unroll (2) with an odd trip count.
    B, M, N, it = 1, 335, 100, 11
    x = jax.random.normal(k3, (B, M, N), dtype=jnp.float32)
    out = jax.block_until_ready(log_optimal_transport(x, it))
    ref = _reference(x, it)
    assert out.shape == (B, M, N)
    assert jnp.allclose(out, ref, atol=1e-4, rtol=1e-4)

    print("KERNEL_OK")
</pallas_src>

<mosaic_0001>
module attributes {stable_mosaic.version = 11 : i64} {
  func.func @_log_ot_kernel(%arg0: i32, %arg1: memref<2x8x8xf32, #tpu.memory_space<vmem>>, %arg2: memref<2x8x8xf32, #tpu.memory_space<vmem>>, %arg3: memref<2x16x128xf32, #tpu.memory_space<vmem>>) attributes {dimension_semantics = [#tpu.dimension_semantics<parallel>], iteration_bounds = array<i64: 1>, scalar_prefetch = 0 : i64, scratch_operands = 1 : i64, tpu.core_type = #tpu.core_type<tc>, window_params = [{transform_indices = @transform_0, window_bounds = array<i64: 2, 8, 8>}, {transform_indices = @transform_1, window_bounds = array<i64: 2, 8, 8>}]} {
    %0 = tpu.iota {dimensions = array<i32: 0>} : vector<16x128xi32>
    %1 = tpu.iota {dimensions = array<i32: 1>} : vector<16x128xi32>
    %c8_i32 = arith.constant 8 : i32
    %2 = vector.broadcast %c8_i32 : i32 to vector<16x128xi32>
    %3 = arith.cmpi sle, %0, %2 : vector<16x128xi32>
    %c8_i32_0 = arith.constant 8 : i32
    %4 = vector.broadcast %c8_i32_0 : i32 to vector<16x128xi32>
    %5 = arith.cmpi sle, %1, %4 : vector<16x128xi32>
    %6 = arith.andi %3, %5 : vector<16x128xi1>
    %cst = arith.constant 0.000000e+00 : f32
    %cst_1 = arith.constant -1.000000e+30 : f32
    %7 = vector.broadcast %cst : f32 to vector<16x128xf32>
    %8 = vector.broadcast %cst_1 : f32 to vector<16x128xf32>
    %9 = arith.select %6, %7, %8 : vector<16x128xi1>, vector<16x128xf32>
    %10 = vector.shape_cast %9 : vector<16x128xf32> to vector<1x16x128xf32>
    %11 = vector.shape_cast %10 : vector<1x16x128xf32> to vector<1x16x128xf32>
    %12 = vector.broadcast %11 : vector<1x16x128xf32> to vector<2x16x128xf32>
    %c0 = arith.constant 0 : index
    %c0_2 = arith.constant 0 : index
    %c0_3 = arith.constant 0 : index
    %13 = vector.load %arg3[%c0, %c0_2, %c0_3] : memref<2x16x128xf32, #tpu.memory_space<vmem>>, vector<2x16x128xf32>
    tpu.vector_store %arg3[%c0, %c0_2, %c0_3], %12 {strides = array<i32>} : memref<2x16x128xf32, #tpu.memory_space<vmem>>, vector<2x16x128xf32>,
    %c0_4 = arith.constant 0 : index
    %c0_5 = arith.constant 0 : index
    %c0_6 = arith.constant 0 : index
    %14 = vector.load %arg1[%c0_4, %c0_5, %c0_6] : memref<2x8x8xf32, #tpu.memory_space<vmem>>, vector<2x8x8xf32>
    %c0_7 = arith.constant 0 : index
    %c0_8 = arith.constant 0 : index
    %c0_9 = arith.constant 0 : index
    %15 = vector.load %arg3[%c0_7, %c0_8, %c0_9] : memref<2x16x128xf32, #tpu.memory_space<vmem>>, vector<2x8x8xf32>
    tpu.vector_store %arg3[%c0_7, %c0_8, %c0_9], %14 {strides = array<i32>} : memref<2x16x128xf32, #tpu.memory_space<vmem>>, vector<2x8x8xf32>,
    %16 = tpu.iota {dimensions = array<i32: 1>} : vector<1x16x1xi32>
    %c8_i32_10 = arith.constant 8 : i32
    %17 = vector.broadcast %c8_i32_10 : i32 to vector<1x16x1xi32>
    %18 = arith.cmpi slt, %16, %17 : vector<1x16x1xi32>
    %19 = tpu.iota {dimensions = array<i32: 2>} : vector<1x1x128xi32>
    %c8_i32_11 = arith.constant 8 : i32
    %20 = vector.broadcast %c8_i32_11 : i32 to vector<1x1x128xi32>
    %21 = arith.cmpi slt, %19, %20 : vector<1x1x128xi32>
    %c0_12 = arith.constant 0 : index
    %c0_13 = arith.constant 0 : index
    %c0_14 = arith.constant 0 : index
    %22 = vector.load %arg3[%c0_12, %c0_13, %c0_14] : memref<2x16x128xf32, #tpu.memory_space<vmem>>, vector<2x16x128xf32>
    %c0_i32 = arith.constant 0 : i32
    %cst_15 = arith.constant dense<0xFF800000> : vector<2x16xf32>
    %23 = vector.multi_reduction <maximumf>, %22, %cst_15 [2] : vector<2x16x128xf32> to vector<2x16xf32>
    %24 = vector.shape_cast %23 : vector<2x16xf32> to vector<2x16x1xf32>
    %25 = vector.broadcast %24 : vector<2x16x1xf32> to vector<2x16x128xf32>
    %26 = arith.subf %22, %25 : vector<2x16x128xf32>
    %27 = math.exp %26 : vector<2x16x128xf32>
    %cst_16 = arith.constant dense<0.000000e+00> : vector<2x16xf32>
    %28 = vector.multi_reduction <add>, %27, %cst_16 [2] : vector<2x16x128xf32> to vector<2x16xf32>
    %29 = vector.shape_cast %28 : vector<2x16xf32> to vector<2x16x1xf32>
    %30 = math.log %29 : vector<2x16x1xf32>
    %31 = arith.addf %24, %30 : vector<2x16x1xf32>
    %cst_17 = arith.constant 0.000000e+00 : f32
    %32 = vector.shape_cast %18 : vector<1x16x1xi1> to vector<1x16x1xi1>
    %33 = vector.broadcast %32 : vector<1x16x1xi1> to vector<2x16x1xi1>
    %34 = vector.broadcast %cst_17 : f32 to vector<2x16x1xf32>
    %35 = arith.select %33, %31, %34 : vector<2x16x1xi1>, vector<2x16x1xf32>
    %36 = vector.broadcast %35 : vector<2x16x1xf32> to vector<2x16x128xf32>
    %37 = arith.subf %22, %36 : vector<2x16x128xf32>
    %cst_18 = arith.constant dense<0xFF800000> : vector<2x128xf32>
    %38 = vector.multi_reduction <maximumf>, %37, %cst_18 [1] : vector<2x16x128xf32> to vector<2x128xf32>
    %39 = vector.shape_cast %38 : vector<2x128xf32> to vector<2x1x128xf32>
    %40 = vector.broadcast %39 : vector<2x1x128xf32> to vector<2x16x128xf32>
    %41 = arith.subf %37, %40 : vector<2x16x128xf32>
    %42 = math.exp %41 : vector<2x16x128xf32>
    %cst_19 = arith.constant dense<0.000000e+00> : vector<2x128xf32>
    %43 = vector.multi_reduction <add>, %42, %cst_19 [1] : vector<2x16x128xf32> to vector<2x128xf32>
    %44 = vector.shape_cast %43 : vector<2x128xf32> to vector<2x1x128xf32>
    %45 = math.log %44 : vector<2x1x128xf32>
    %46 = arith.addf %39, %45 : vector<2x1x128xf32>
    %cst_20 = arith.constant 0.000000e+00 : f32
    %47 = vector.shape_cast %21 : vector<1x1x128xi1> to vector<1x1x128xi1>
    %48 = vector.broadcast %47 : vector<1x1x128xi1> to vector<2x1x128xi1>
    %49 = vector.broadcast %cst_20 : f32 to vector<2x1x128xf32>
    %50 = arith.select %48, %46, %49 : vector<2x1x128xi1>, vector<2x1x128xf32>
    %51 = vector.broadcast %50 : vector<2x1x128xf32> to vector<2x16x128xf32>
    %52 = arith.subf %37, %51 : vector<2x16x128xf32>
    %c1_i32 = arith.constant 1 : i32
    %cst_21 = arith.constant dense<0xFF800000> : vector<2x16xf32>
    %53 = vector.multi_reduction <maximumf>, %52, %cst_21 [2] : vector<2x16x128xf32> to vector<2x16xf32>
    %54 = vector.shape_cast %53 : vector<2x16xf32> to vector<2x16x1xf32>
    %55 = vector.broadcast %54 : vector<2x16x1xf32> to vector<2x16x128xf32>
    %56 = arith.subf %52, %55 : vector<2x16x128xf32>
    %57 = math.exp %56 : vector<2x16x128xf32>
    %cst_22 = arith.constant dense<0.000000e+00> : vector<2x16xf32>
    %58 = vector.multi_reduction <add>, %57, %cst_22 [2] : vector<2x16x128xf32> to vector<2x16xf32>
    %59 = vector.shape_cast %58 : vector<2x16xf32> to vector<2x16x1xf32>
    %60 = math.log %59 : vector<2x16x1xf32>
    %61 = arith.addf %54, %60 : vector<2x16x1xf32>
    %cst_23 = arith.constant 0.000000e+00 : f32
    %62 = vector.shape_cast %18 : vector<1x16x1xi1> to vector<1x16x1xi1>
    %63 = vector.broadcast %62 : vector<1x16x1xi1> to vector<2x16x1xi1>
    %64 = vector.broadcast %cst_23 : f32 to vector<2x16x1xf32>
    %65 = arith.select %63, %61, %64 : vector<2x16x1xi1>, vector<2x16x1xf32>
    %66 = vector.broadcast %65 : vector<2x16x1xf32> to vector<2x16x128xf32>
    %67 = arith.subf %52, %66 : vector<2x16x128xf32>
    %cst_24 = arith.constant dense<0xFF800000> : vector<2x128xf32>
    %68 = vector.multi_reduction <maximumf>, %67, %cst_24 [1] : vector<2x16x128xf32> to vector<2x128xf32>
    %69 = vector.shape_cast %68 : vector<2x128xf32> to vector<2x1x128xf32>
    %70 = vector.broadcast %69 : vector<2x1x128xf32> to vector<2x16x128xf32>
    %71 = arith.subf %67, %70 : vector<2x16x128xf32>
    %72 = math.exp %71 : vector<2x16x128xf32>
    %cst_25 = arith.constant dense<0.000000e+00> : vector<2x128xf32>
    %73 = vector.multi_reduction <add>, %72, %cst_25 [1] : vector<2x16x128xf32> to vector<2x128xf32>
    %74 = vector.shape_cast %73 : vector<2x128xf32> to vector<2x1x128xf32>
    %75 = math.log %74 : vector<2x1x128xf32>
    %76 = arith.addf %69, %75 : vector<2x1x128xf32>
    %cst_26 = arith.constant 0.000000e+00 : f32
    %77 = vector.shape_cast %21 : vector<1x1x128xi1> to vector<1x1x128xi1>
    %78 = vector.broadcast %77 : vector<1x1x128xi1> to vector<2x1x128xi1>
    %79 = vector.broadcast %cst_26 : f32 to vector<2x1x128xf32>
    %80 = arith.select %78, %76, %79 : vector<2x1x128xi1>, vector<2x1x128xf32>
    %81 = vector.broadcast %80 : vector<2x1x128xf32> to vector<2x16x128xf32>
    %82 = arith.subf %67, %81 : vector<2x16x128xf32>
    %c2_i32 = arith.constant 2 : i32
    %cst_27 = arith.constant dense<0xFF800000> : vector<2x16xf32>
    %83 = vector.multi_reduction <maximumf>, %82, %cst_27 [2] : vector<2x16x128xf32> to vector<2x16xf32>
    %84 = vector.shape_cast %83 : vector<2x16xf32> to vector<2x16x1xf32>
    %85 = vector.broadcast %84 : vector<2x16x1xf32> to vector<2x16x128xf32>
    %86 = arith.subf %82, %85 : vector<2x16x128xf32>
    %87 = math.exp %86 : vector<2x16x128xf32>
    %cst_28 = arith.constant dense<0.000000e+00> : vector<2x16xf32>
    %88 = vector.multi_reduction <add>, %87, %cst_28 [2] : vector<2x16x128xf32> to vector<2x16xf32>
    %89 = vector.shape_cast %88 : vector<2x16xf32> to vector<2x16x1xf32>
    %90 = math.log %89 : vector<2x16x1xf32>
    %91 = arith.addf %84, %90 : vector<2x16x1xf32>
    %cst_29 = arith.constant 0.000000e+00 : f32
    %92 = vector.shape_cast %18 : vector<1x16x1xi1> to vector<1x16x1xi1>
    %93 = vector.broadcast %92 : vector<1x16x1xi1> to vector<2x16x1xi1>
    %94 = vector.broadcast %cst_29 : f32 to vector<2x16x1xf32>
    %95 = arith.select %93, %91, %94 : vector<2x16x1xi1>, vector<2x16x1xf32>
    %96 = vector.broadcast %95 : vector<2x16x1xf32> to vector<2x16x128xf32>
    %97 = arith.subf %82, %96 : vector<2x16x128xf32>
    %cst_30 = arith.constant dense<0xFF800000> : vector<2x128xf32>
    %98 = vector.multi_reduction <maximumf>, %97, %cst_30 [1] : vector<2x16x128xf32> to vector<2x128xf32>
    %99 = vector.shape_cast %98 : vector<2x128xf32> to vector<2x1x128xf32>
    %100 = vector.broadcast %99 : vector<2x1x128xf32> to vector<2x16x128xf32>
    %101 = arith.subf %97, %100 : vector<2x16x128xf32>
    %102 = math.exp %101 : vector<2x16x128xf32>
    %cst_31 = arith.constant dense<0.000000e+00> : vector<2x128xf32>
    %103 = vector.multi_reduction <add>, %102, %cst_31 [1] : vector<2x16x128xf32> to vector<2x128xf32>
    %104 = vector.shape_cast %103 : vector<2x128xf32> to vector<2x1x128xf32>
    %105 = math.log %104 : vector<2x1x128xf32>
    %106 = arith.addf %99, %105 : vector<2x1x128xf32>
    %cst_32 = arith.constant 0.000000e+00 : f32
    %107 = vector.shape_cast %21 : vector<1x1x128xi1> to vector<1x1x128xi1>
    %108 = vector.broadcast %107 : vector<1x1x128xi1> to vector<2x1x128xi1>
    %109 = vector.broadcast %cst_32 : f32 to vector<2x1x128xf32>
    %110 = arith.select %108, %106, %109 : vector<2x1x128xi1>, vector<2x1x128xf32>
    %111 = vector.broadcast %110 : vector<2x1x128xf32> to vector<2x16x128xf32>
    %112 = arith.subf %97, %111 : vector<2x16x128xf32>
    %c3_i32 = arith.constant 3 : i32
    %cst_33 = arith.constant dense<0xFF800000> : vector<2x16xf32>
    %113 = vector.multi_reduction <maximumf>, %112, %cst_33 [2] : vector<2x16x128xf32> to vector<2x16xf32>
    %114 = vector.shape_cast %113 : vector<2x16xf32> to vector<2x16x1xf32>
    %115 = vector.broadcast %114 : vector<2x16x1xf32> to vector<2x16x128xf32>
    %116 = arith.subf %112, %115 : vector<2x16x128xf32>
    %117 = math.exp %116 : vector<2x16x128xf32>
    %cst_34 = arith.constant dense<0.000000e+00> : vector<2x16xf32>
    %118 = vector.multi_reduction <add>, %117, %cst_34 [2] : vector<2x16x128xf32> to vector<2x16xf32>
    %119 = vector.shape_cast %118 : vector<2x16xf32> to vector<2x16x1xf32>
    %120 = math.log %119 : vector<2x16x1xf32>
    %121 = arith.addf %114, %120 : vector<2x16x1xf32>
    %cst_35 = arith.constant 0.000000e+00 : f32
    %122 = vector.shape_cast %18 : vector<1x16x1xi1> to vector<1x16x1xi1>
    %123 = vector.broadcast %122 : vector<1x16x1xi1> to vector<2x16x1xi1>
    %124 = vector.broadcast %cst_35 : f32 to vector<2x16x1xf32>
    %125 = arith.select %123, %121, %124 : vector<2x16x1xi1>, vector<2x16x1xf32>
    %126 = vector.broadcast %125 : vector<2x16x1xf32> to vector<2x16x128xf32>
    %127 = arith.subf %112, %126 : vector<2x16x128xf32>
    %cst_36 = arith.constant dense<0xFF800000> : vector<2x128xf32>
    %128 = vector.multi_reduction <maximumf>, %127, %cst_36 [1] : vector<2x16x128xf32> to vector<2x128xf32>
    %129 = vector.shape_cast %128 : vector<2x128xf32> to vector<2x1x128xf32>
    %130 = vector.broadcast %129 : vector<2x1x128xf32> to vector<2x16x128xf32>
    %131 = arith.subf %127, %130 : vector<2x16x128xf32>
    %132 = math.exp %131 : vector<2x16x128xf32>
    %cst_37 = arith.constant dense<0.000000e+00> : vector<2x128xf32>
    %133 = vector.multi_reduction <add>, %132, %cst_37 [1] : vector<2x16x128xf32> to vector<2x128xf32>
    %134 = vector.shape_cast %133 : vector<2x128xf32> to vector<2x1x128xf32>
    %135 = math.log %134 : vector<2x1x128xf32>
    %136 = arith.addf %129, %135 : vector<2x1x128xf32>
    %cst_38 = arith.constant 0.000000e+00 : f32
    %137 = vector.shape_cast %21 : vector<1x1x128xi1> to vector<1x1x128xi1>
    %138 = vector.broadcast %137 : vector<1x1x128xi1> to vector<2x1x128xi1>
    %139 = vector.broadcast %cst_38 : f32 to vector<2x1x128xf32>
    %140 = arith.select %138, %136, %139 : vector<2x1x128xi1>, vector<2x1x128xf32>
    %141 = vector.broadcast %140 : vector<2x1x128xf32> to vector<2x16x128xf32>
    %142 = arith.subf %127, %141 : vector<2x16x128xf32>
    %c4_i32 = arith.constant 4 : i32
    %cst_39 = arith.constant dense<0xFF800000> : vector<2x16xf32>
    %143 = vector.multi_reduction <maximumf>, %142, %cst_39 [2] : vector<2x16x128xf32> to vector<2x16xf32>
    %144 = vector.shape_cast %143 : vector<2x16xf32> to vector<2x16x1xf32>
    %145 = vector.broadcast %144 : vector<2x16x1xf32> to vector<2x16x128xf32>
    %146 = arith.subf %142, %145 : vector<2x16x128xf32>
    %147 = math.exp %146 : vector<2x16x128xf32>
    %cst_40 = arith.constant dense<0.000000e+00> : vector<2x16xf32>
    %148 = vector.multi_reduction <add>, %147, %cst_40 [2] : vector<2x16x128xf32> to vector<2x16xf32>
    %149 = vector.shape_cast %148 : vector<2x16xf32> to vector<2x16x1xf32>
    %150 = math.log %149 : vector<2x16x1xf32>
    %151 = arith.addf %144, %150 : vector<2x16x1xf32>
    %cst_41 = arith.constant 0.000000e+00 : f32
    %152 = vector.shape_cast %18 : vector<1x16x1xi1> to vector<1x16x1xi1>
    %153 = vector.broadcast %152 : vector<1x16x1xi1> to vector<2x16x1xi1>
    %154 = vector.broadcast %cst_41 : f32 to vector<2x16x1xf32>
    %155 = arith.select %153, %151, %154 : vector<2x16x1xi1>, vector<2x16x1xf32>
    %156 = vector.broadcast %155 : vector<2x16x1xf32> to vector<2x16x128xf32>
    %157 = arith.subf %142, %156 : vector<2x16x128xf32>
    %cst_42 = arith.constant dense<0xFF800000> : vector<2x128xf32>
    %158 = vector.multi_reduction <maximumf>, %157, %cst_42 [1] : vector<2x16x128xf32> to vector<2x128xf32>
    %159 = vector.shape_cast %158 : vector<2x128xf32> to vector<2x1x128xf32>
    %160 = vector.broadcast %159 : vector<2x1x128xf32> to vector<2x16x128xf32>
    %161 = arith.subf %157, %160 : vector<2x16x128xf32>
    %162 = math.exp %161 : vector<2x16x128xf32>
    %cst_43 = arith.constant dense<0.000000e+00> : vector<2x128xf32>
    %163 = vector.multi_reduction <add>, %162, %cst_43 [1] : vector<2x16x128xf32> to vector<2x128xf32>
    %164 = vector.shape_cast %163 : vector<2x128xf32> to vector<2x1x128xf32>
    %165 = math.log %164 : vector<2x1x128xf32>
    %166 = arith.addf %159, %165 : vector<2x1x128xf32>
    %cst_44 = arith.constant 0.000000e+00 : f32
    %167 = vector.shape_cast %21 : vector<1x1x128xi1> to vector<1x1x128xi1>
    %168 = vector.broadcast %167 : vector<1x1x128xi1> to vector<2x1x128xi1>
    %169 = vector.broadcast %cst_44 : f32 to vector<2x1x128xf32>
    %170 = arith.select %168, %166, %169 : vector<2x1x128xi1>, vector<2x1x128xf32>
    %171 = vector.broadcast %170 : vector<2x1x128xf32> to vector<2x16x128xf32>
    %172 = arith.subf %157, %171 : vector<2x16x128xf32>
    %c0_45 = arith.constant 0 : index
    %c0_46 = arith.constant 0 : index
    %c0_47 = arith.constant 0 : index
    %173 = vector.load %arg3[%c0_45, %c0_46, %c0_47] : memref<2x16x128xf32, #tpu.memory_space<vmem>>, vector<2x16x128xf32>
    tpu.vector_store %arg3[%c0_45, %c0_46, %c0_47], %172 {strides = array<i32>} : memref<2x16x128xf32, #tpu.memory_space<vmem>>, vector<2x16x128xf32>,
    %c0_48 = arith.constant 0 : index
    %c0_49 = arith.constant 0 : index
    %c0_50 = arith.constant 0 : index
    %174 = vector.load %arg3[%c0_48, %c0_49, %c0_50] : memref<2x16x128xf32, #tpu.memory_space<vmem>>, vector<2x8x8xf32>
    %c0_51 = arith.constant 0 : index
    %c0_52 = arith.constant 0 : index
    %c0_53 = arith.constant 0 : index
    %175 = vector.load %arg2[%c0_51, %c0_52, %c0_53] : memref<2x8x8xf32, #tpu.memory_space<vmem>>, vector<2x8x8xf32>
    tpu.vector_store %arg2[%c0_51, %c0_52, %c0_53], %174 {strides = array<i32>} : memref<2x8x8xf32, #tpu.memory_space<vmem>>, vector<2x8x8xf32>,
    return
  }
  func.func @transform_0(%arg0: i32) -> (i32, i32, i32) {
    %c0_i32 = arith.constant 0 : i32
    %c0_i32_0 = arith.constant 0 : i32
    %c0_i32_1 = arith.constant 0 : i32
    return %arg0, %c0_i32, %c0_i32_0 : i32, i32, i32
  }
  func.func @transform_1(%arg0: i32) -> (i32, i32, i32) {
    %c0_i32 = arith.constant 0 : i32
    %c0_i32_0 = arith.constant 0 : i32
    %c0_i32_1 = arith.constant 0 : i32
    return %arg0, %c0_i32, %c0_i32_0 : i32, i32, i32
  }
}

</mosaic_0001>

<llo_original>
// kernel: tpu_custom_call.1
$region0: #{tpu_custom_call.1}
  #allocation0 [shape = 'u32[]', space=smem, size = 0x4, offset = 0x4, fixed_abs, tag = 'smem constant byte address 0x4 - core index']
  #allocation1 [shape = 'u32[144,128]{1,0:T(1,128)}', space=vmem, size = 0x12000, scoped, tag = 'internal scratch']
  #allocation2 [shape = 'f32[2,16,128]{2,1,0:T(8,128)}', space=vmem, size = 0x4000, scoped, tag = 'scratch operand']
  %s0 = inlined_call_operand.hbm [shape: f32[2,8,8], index: 0, kind: input, shape index: {}]
  %s1 = inlined_call_operand.hbm [shape: f32[2,8,8], index: 1, kind: output, shape index: {}]
  %s2 = sld [smem:[#allocation0]]
  $region18: #{tpu_custom_call.1} parent=0
    _
  %s4 = ssub.s32 1, %s2
  %s5 = scalar_select 0, %s4, %s2
  $region1: #{tpu_custom_call.1} parent=0
    #allocation3 [shape = 'u8[8192]{0}', space=vmem, size = 0x2000, scoped, tag = 'input window, operand 0, single buffered']
    #allocation4 [shape = 's32[1]{0}', space=sflag, size = 0x4, scoped, tag = 'scoped memory for tpu_custom_call.1']
    #allocation5 [shape = 's32[1]{0}', space=sflag, size = 0x4, scoped, tag = 'scoped memory for tpu_custom_call.1']
    #allocation6 [shape = 'u8[8192]{0}', space=vmem, size = 0x2000, scoped, tag = 'output window, operand 0, single buffered']
    %6 = vsyncpa [#allocation4], 0
    %7 = vsyncpa [#allocation5], 0
    // Predicated region
    $region2: #{tpu_custom_call.1} parent=1 // pred_check
      _
    $region3: #{tpu_custom_call.1} parent=1 // pred_check_branch
      %9 = sbr.rel (0) target = $region5
    $region4: #{tpu_custom_call.1} parent=1 // pred_region
      %s11 = ssub.s32 256, 256
      %12 = vsyncadd [#allocation4], %s11
      %s13 = sshll.u32 [#allocation3], 4
      %s14 = int_to_ptr.vmem [resolvable:$true] %s13
      %19 = dma.hbm_to_vmem [thread:$0]  %s0, 256, %s14, [#allocation4], 128, 128, 8
    $region5: #{tpu_custom_call.1} parent=1 // pred_fallthru
      _
    // Predicated region
    $region6: #{tpu_custom_call.1} parent=1 // pred_check
      _
    $region7: #{tpu_custom_call.1} parent=1 // pred_check_branch
      %21 = sbr.rel (0) target = $region9
    $region8: #{tpu_custom_call.1} parent=1 // pred_region
      %22 = dma.done [#allocation4], 256
    $region9: #{tpu_custom_call.1} parent=1 // pred_fallthru
      _
    %v23 = vlaneseq
    %v24 = vshrl.u32 %v23, 7
    %v25 = vadd.s32 %v24, 8
    %v26 = vlaneseq
    %v27 = vand.u32 %v26, 127
    %vm28 = vcmp.le.s32.totalorder %v24, 8
    %vm29 = vcmp.le.s32.totalorder %v25, 8
    %vm30 = vcmp.le.s32.totalorder %v27, 8
    %vm31 = vmand %vm28, %vm30
    %vm32 = vmand %vm29, %vm30
    %v33 = vsel %vm31, 0.0, -1e+30
    %v34 = vsel %vm32, 0.0, -1e+30
    %35 = vst [vmem:[#allocation2] sm:$0xff] %v33
    %36 = vst [vmem:[#allocation2 + $0x8] sm:$0xff] %v34
    %37 = vst [vmem:[#allocation2 + $0x10] sm:$0xff] %v33
    %38 = vst [vmem:[#allocation2 + $0x18] sm:$0xff] %v34
    %v39 = vld [vmem:[#allocation3] sm:$0xff]
    %v40 = vld [vmem:[#allocation3 + $0x8] sm:$0xff]
    %vm41 = vcmask 64512
    %42 = vst.msk [vmem:[#allocation2] sm:$0xff] %vm41, %v39
    %43 = vst.msk [vmem:[#allocation2 + $0x10] sm:$0xff] %vm41, %v40
    %vm44 = vcmp.lt.s32.totalorder %v24, 8
    %vm45 = vcmp.lt.s32.totalorder %v25, 8
    %vm46 = vcmp.lt.s32.totalorder %v27, 8
    %v47 = vld [vmem:[#allocation2] sm:$0xff]
    %v48 = vld [vmem:[#allocation2 + $0x8] sm:$0xff]
    %v49 = vld [vmem:[#allocation2 + $0x10] sm:$0xff]
    %v50 = vld [vmem:[#allocation2 + $0x18] sm:$0xff]
    %51 = vmax.xlane.f32.xlu0 %v47
    %v52 = vpop.xlane.xlu0 %51
    %53 = vmax.xlane.f32.xlu0 %v48
    %v54 = vpop.xlane.xlu0 %53
    %55 = vmax.xlane.f32.xlu0 %v49
    %v56 = vpop.xlane.xlu0 %55
    %57 = vmax.xlane.f32.xlu0 %v50
    %v58 = vpop.xlane.xlu0 %57
    %v59 = vsub.f32 %v47, %v52
    %v60 = vsub.f32 %v48, %v54
    %v61 = vsub.f32 %v49, %v56
    %v62 = vsub.f32 %v50, %v58
    %v63 = vmul.f32 %v59, 1.442695
    %v64 = vpow.pop %v63
    %v65 = vmul.f32 %v60, 1.442695
    %v66 = vpow.pop %v65
    %v67 = vmul.f32 %v61, 1.442695
    %v68 = vpow.pop %v67
    %v69 = vmul.f32 %v62, 1.442695
    %v70 = vpow.pop %v69
    %71 = vadd.xlane.f32.xlu0 %v64
    %v72 = vpop.xlane.xlu0 %71
    %73 = vadd.xlane.f32.xlu0 %v66
    %v74 = vpop.xlane.xlu0 %73
    %75 = vadd.xlane.f32.xlu0 %v68
    %v76 = vpop.xlane.xlu0 %75
    %77 = vadd.xlane.f32.xlu0 %v70
    %v78 = vpop.xlane.xlu0 %77
    %v79 = vlog2.pop %v72
    %v80 = vmul.f32 %v79, 0.6931472
    %v81 = vlog2.pop %v74
    %v82 = vmul.f32 %v81, 0.6931472
    %v83 = vlog2.pop %v76
    %v84 = vmul.f32 %v83, 0.6931472
    %v85 = vlog2.pop %v78
    %v86 = vmul.f32 %v85, 0.6931472
    %v87 = vadd.f32 %v52, %v80
    %v88 = vadd.f32 %v54, %v82
    %v89 = vadd.f32 %v56, %v84
    %v90 = vadd.f32 %v58, %v86
    %v91 = vsel %vm44, 1, 0
    %v92 = vsel %vm45, 1, 0
    %vm93 = vcmp.eq.s32.totalorder %v91, 1
    %vm94 = vcmp.eq.s32.totalorder %v92, 1
    %v95 = vsel %vm93, %v87, 0.0
    %v96 = vsel %vm94, %v88, 0.0
    %v97 = vsel %vm93, %v89, 0.0
    %v98 = vsel %vm94, %v90, 0.0
    %v99 = vsub.f32 %v47, %v95
    %v100 = vsub.f32 %v48, %v96
    %v101 = vsub.f32 %v49, %v97
    %v102 = vsub.f32 %v50, %v98
    %v103 = vmax.f32 %v99, %v100
    %v104 = vrot.slane %v103, 4
    %v105 = vmax.f32 %v103, %v104
    %v106 = vrot.slane %v105, 2
    %v107 = vmax.f32 %v105, %v106
    %v108 = vrot.slane %v107, 1
    %v109 = vmax.f32 %v107, %v108
    %v110 = vmax.f32 %v101, %v102
    %v111 = vrot.slane %v110, 4
    %v112 = vmax.f32 %v110, %v111
    %v113 = vrot.slane %v112, 2
    %v114 = vmax.f32 %v112, %v113
    %v115 = vrot.slane %v114, 1
    %v116 = vmax.f32 %v114, %v115
    %v117 = vsub.f32 %v99, %v109
    %v118 = vsub.f32 %v100, %v109
    %v119 = vsub.f32 %v101, %v116
    %v120 = vsub.f32 %v102, %v116
    %v121 = vmul.f32 %v117, 1.442695
    %v122 = vpow.pop %v121
    %v123 = vmul.f32 %v118, 1.442695
    %v124 = vpow.pop %v123
    %v125 = vmul.f32 %v119, 1.442695
    %v126 = vpow.pop %v125
    %v127 = vmul.f32 %v120, 1.442695
    %v128 = vpow.pop %v127
    %v129 = vadd.f32 %v122, %v124
    %v130 = vrot.slane %v129, 4
    %v131 = vadd.f32 %v129, %v130
    %v132 = vrot.slane %v131, 2
    %v133 = vadd.f32 %v131, %v132
    %v134 = vrot.slane %v133, 1
    %v135 = vadd.f32 %v133, %v134
    %v136 = vadd.f32 %v126, %v128
    %v137 = vrot.slane %v136, 4
    %v138 = vadd.f32 %v136, %v137
    %v139 = vrot.slane %v138, 2
    %v140 = vadd.f32 %v138, %v139
    %v141 = vrot.slane %v140, 1
    %v142 = vadd.f32 %v140, %v141
    %v143 = vlog2.pop %v135
    %v144 = vmul.f32 %v143, 0.6931472
    %v145 = vlog2.pop %v142
    %v146 = vmul.f32 %v145, 0.6931472
    %v147 = vadd.f32 %v109, %v144
    %v148 = vadd.f32 %v116, %v146
    %v149 = vsel %vm46, 1, 0
    %vm150 = vcmp.eq.s32.totalorder %v149, 1
    %v151 = vsel %vm150, %v147, 0.0
    %v152 = vsel %vm150, %v148, 0.0
    %v153 = vsub.f32 %v99, %v151
    %v154 = vsub.f32 %v100, %v151
    %v155 = vsub.f32 %v101, %v152
    %v156 = vsub.f32 %v102, %v152
    %157 = vmax.xlane.f32.xlu0 %v153
    %v158 = vpop.xlane.xlu0 %157
    %159 = vmax.xlane.f32.xlu0 %v154
    %v160 = vpop.xlane.xlu0 %159
    %161 = vmax.xlane.f32.xlu0 %v155
    %v162 = vpop.xlane.xlu0 %161
    %163 = vmax.xlane.f32.xlu0 %v156
    %v164 = vpop.xlane.xlu0 %163
    %v165 = vsub.f32 %v153, %v158
    %v166 = vsub.f32 %v154, %v160
    %v167 = vsub.f32 %v155, %v162
    %v168 = vsub.f32 %v156, %v164
    %v169 = vmul.f32 %v165, 1.442695
    %v170 = vpow.pop %v169
    %v171 = vmul.f32 %v166, 1.442695
    %v172 = vpow.pop %v171
    %v173 = vmul.f32 %v167, 1.442695
    %v174 = vpow.pop %v173
    %v175 = vmul.f32 %v168, 1.442695
    %v176 = vpow.pop %v175
    %177 = vadd.xlane.f32.xlu0 %v170
    %v178 = vpop.xlane.xlu0 %177
    %179 = vadd.xlane.f32.xlu0 %v172
    %v180 = vpop.xlane.xlu0 %179
    %181 = vadd.xlane.f32.xlu0 %v174
    %v182 = vpop.xlane.xlu0 %181
    %183 = vadd.xlane.f32.xlu0 %v176
    %v184 = vpop.xlane.xlu0 %183
    %v185 = vlog2.pop %v178
    %v186 = vmul.f32 %v185, 0.6931472
    %v187 = vlog2.pop %v180
    %v188 = vmul.f32 %v187, 0.6931472
    %v189 = vlog2.pop %v182
    %v190 = vmul.f32 %v189, 0.6931472
    %v191 = vlog2.pop %v184
    %v192 = vmul.f32 %v191, 0.6931472
    %v193 = vadd.f32 %v158, %v186
    %v194 = vadd.f32 %v160, %v188
    %v195 = vadd.f32 %v162, %v190
    %v196 = vadd.f32 %v164, %v192
    %v197 = vsel %vm93, %v193, 0.0
    %v198 = vsel %vm94, %v194, 0.0
    %v199 = vsel %vm93, %v195, 0.0
    %v200 = vsel %vm94, %v196, 0.0
    %v201 = vsub.f32 %v153, %v197
    %v202 = vsub.f32 %v154, %v198
    %v203 = vsub.f32 %v155, %v199
    %v204 = vsub.f32 %v156, %v200
    %v205 = vmax.f32 %v201, %v202
    %v206 = vrot.slane %v205, 4
    %v207 = vmax.f32 %v205, %v206
    %v208 = vrot.slane %v207, 2
    %v209 = vmax.f32 %v207, %v208
    %v210 = vrot.slane %v209, 1
    %v211 = vmax.f32 %v209, %v210
    %v212 = vmax.f32 %v203, %v204
    %v213 = vrot.slane %v212, 4
    %v214 = vmax.f32 %v212, %v213
    %v215 = vrot.slane %v214, 2
    %v216 = vmax.f32 %v214, %v215
    %v217 = vrot.slane %v216, 1
    %v218 = vmax.f32 %v216, %v217
    %v219 = vsub.f32 %v201, %v211
    %v220 = vsub.f32 %v202, %v211
    %v221 = vsub.f32 %v203, %v218
    %v222 = vsub.f32 %v204, %v218
    %v223 = vmul.f32 %v219, 1.442695
    %v224 = vpow.pop %v223
    %v225 = vmul.f32 %v220, 1.442695
    %v226 = vpow.pop %v225
    %v227 = vmul.f32 %v221, 1.442695
    %v228 = vpow.pop %v227
    %v229 = vmul.f32 %v222, 1.442695
    %v230 = vpow.pop %v229
    %v231 = vadd.f32 %v224, %v226
    %v232 = vrot.slane %v231, 4
    %v233 = vadd.f32 %v231, %v232
    %v234 = vrot.slane %v233, 2
    %v235 = vadd.f32 %v233, %v234
    %v236 = vrot.slane %v235, 1
    %v237 = vadd.f32 %v235, %v236
    %v238 = vadd.f32 %v228, %v230
    %v239 = vrot.slane %v238, 4
    %v240 = vadd.f32 %v238, %v239
    %v241 = vrot.slane %v240, 2
    %v242 = vadd.f32 %v240, %v241
    %v243 = vrot.slane %v242, 1
    %v244 = vadd.f32 %v242, %v243
    %v245 = vlog2.pop %v237
    %v246 = vmul.f32 %v245, 0.6931472
    %v247 = vlog2.pop %v244
    %v248 = vmul.f32 %v247, 0.6931472
    %v249 = vadd.f32 %v211, %v246
    %v250 = vadd.f32 %v218, %v248
    %v251 = vsel %vm150, %v249, 0.0
    %v252 = vsel %vm150, %v250, 0.0
    %v253 = vsub.f32 %v201, %v251
    %v254 = vsub.f32 %v202, %v251
    %v255 = vsub.f32 %v203, %v252
    %v256 = vsub.f32 %v204, %v252
    %257 = vmax.xlane.f32.xlu0 %v253
    %v258 = vpop.xlane.xlu0 %257
    %259 = vmax.xlane.f32.xlu0 %v254
    %v260 = vpop.xlane.xlu0 %259
    %261 = vmax.xlane.f32.xlu0 %v255
    %v262 = vpop.xlane.xlu0 %261
    %263 = vmax.xlane.f32.xlu0 %v256
    %v264 = vpop.xlane.xlu0 %263
    %v265 = vsub.f32 %v253, %v258
    %v266 = vsub.f32 %v254, %v260
    %v267 = vsub.f32 %v255, %v262
    %v268 = vsub.f32 %v256, %v264
    %v269 = vmul.f32 %v265, 1.442695
    %v270 = vpow.pop %v269
    %v271 = vmul.f32 %v266, 1.442695
    %v272 = vpow.pop %v271
    %v273 = vmul.f32 %v267, 1.442695
    %v274 = vpow.pop %v273
    %v275 = vmul.f32 %v268, 1.442695
    %v276 = vpow.pop %v275
    %277 = vadd.xlane.f32.xlu0 %v270
    %v278 = vpop.xlane.xlu0 %277
    %279 = vadd.xlane.f32.xlu0 %v272
    %v280 = vpop.xlane.xlu0 %279
    %281 = vadd.xlane.f32.xlu0 %v274
    %v282 = vpop.xlane.xlu0 %281
    %283 = vadd.xlane.f32.xlu0 %v276
    %v284 = vpop.xlane.xlu0 %283
    %v285 = vlog2.pop %v278
    %v286 = vmul.f32 %v285, 0.6931472
    %v287 = vlog2.pop %v280
    %v288 = vmul.f32 %v287, 0.6931472
    %v289 = vlog2.pop %v282
    %v290 = vmul.f32 %v289, 0.6931472
    %v291 = vlog2.pop %v284
    %v292 = vmul.f32 %v291, 0.6931472
    %v293 = vadd.f32 %v258, %v286
    %v294 = vadd.f32 %v260, %v288
    %v295 = vadd.f32 %v262, %v290
    %v296 = vadd.f32 %v264, %v292
    %v297 = vsel %vm93, %v293, 0.0
    %v298 = vsel %vm94, %v294, 0.0
    %v299 = vsel %vm93, %v295, 0.0
    %v300 = vsel %vm94, %v296, 0.0
    %v301 = vsub.f32 %v253, %v297
    %v302 = vsub.f32 %v254, %v298
    %v303 = vsub.f32 %v255, %v299
    %v304 = vsub.f32 %v256, %v300
    %v305 = vmax.f32 %v301, %v302
    %v306 = vrot.slane %v305, 4
    %v307 = vmax.f32 %v305, %v306
    %v308 = vrot.slane %v307, 2
    %v309 = vmax.f32 %v307, %v308
    %v310 = vrot.slane %v309, 1
    %v311 = vmax.f32 %v309, %v310
    %v312 = vmax.f32 %v303, %v304
    %v313 = vrot.slane %v312, 4
    %v314 = vmax.f32 %v312, %v313
    %v315 = vrot.slane %v314, 2
    %v316 = vmax.f32 %v314, %v315
    %v317 = vrot.slane %v316, 1
    %v318 = vmax.f32 %v316, %v317
    %v319 = vsub.f32 %v301, %v311
    %v320 = vsub.f32 %v302, %v311
    %v321 = vsub.f32 %v303, %v318
    %v322 = vsub.f32 %v304, %v318
    %v323 = vmul.f32 %v319, 1.442695
    %v324 = vpow.pop %v323
    %v325 = vmul.f32 %v320, 1.442695
    %v326 = vpow.pop %v325
    %v327 = vmul.f32 %v321, 1.442695
    %v328 = vpow.pop %v327
    %v329 = vmul.f32 %v322, 1.442695
    %v330 = vpow.pop %v329
    %v331 = vadd.f32 %v324, %v326
    %v332 = vrot.slane %v331, 4
    %v333 = vadd.f32 %v331, %v332
    %v334 = vrot.slane %v333, 2
    %v335 = vadd.f32 %v333, %v334
    %v336 = vrot.slane %v335, 1
    %v337 = vadd.f32 %v335, %v336
    %v338 = vadd.f32 %v328, %v330
    %v339 = vrot.slane %v338, 4
    %v340 = vadd.f32 %v338, %v339
    %v341 = vrot.slane %v340, 2
    %v342 = vadd.f32 %v340, %v341
    %v343 = vrot.slane %v342, 1
    %v344 = vadd.f32 %v342, %v343
    %v345 = vlog2.pop %v337
    %v346 = vmul.f32 %v345, 0.6931472
    %v347 = vlog2.pop %v344
    %v348 = vmul.f32 %v347, 0.6931472
    %v349 = vadd.f32 %v311, %v346
    %v350 = vadd.f32 %v318, %v348
    %v351 = vsel %vm150, %v349, 0.0
    %v352 = vsel %vm150, %v350, 0.0
    %v353 = vsub.f32 %v301, %v351
    %v354 = vsub.f32 %v302, %v351
    %v355 = vsub.f32 %v303, %v352
    %v356 = vsub.f32 %v304, %v352
    %357 = vmax.xlane.f32.xlu0 %v353
    %v358 = vpop.xlane.xlu0 %357
    %359 = vmax.xlane.f32.xlu0 %v354
    %v360 = vpop.xlane.xlu0 %359
    %361 = vmax.xlane.f32.xlu0 %v355
    %v362 = vpop.xlane.xlu0 %361
    %363 = vmax.xlane.f32.xlu0 %v356
    %v364 = vpop.xlane.xlu0 %363
    %v365 = vsub.f32 %v353, %v358
    %v366 = vsub.f32 %v354, %v360
    %v367 = vsub.f32 %v355, %v362
    %v368 = vsub.f32 %v356, %v364
    %v369 = vmul.f32 %v365, 1.442695
    %v370 = vpow.pop %v369
    %v371 = vmul.f32 %v366, 1.442695
    %v372 = vpow.pop %v371
    %v373 = vmul.f32 %v367, 1.442695
    %v374 = vpow.pop %v373
    %v375 = vmul.f32 %v368, 1.442695
    %v376 = vpow.pop %v375
    %377 = vadd.xlane.f32.xlu0 %v370
    %v378 = vpop.xlane.xlu0 %377
    %379 = vadd.xlane.f32.xlu0 %v372
    %v380 = vpop.xlane.xlu0 %379
    %381 = vadd.xlane.f32.xlu0 %v374
    %v382 = vpop.xlane.xlu0 %381
    %383 = vadd.xlane.f32.xlu0 %v376
    %v384 = vpop.xlane.xlu0 %383
    %v385 = vlog2.pop %v378
    %v386 = vmul.f32 %v385, 0.6931472
    %v387 = vlog2.pop %v380
    %v388 = vmul.f32 %v387, 0.6931472
    %v389 = vlog2.pop %v382
    %v390 = vmul.f32 %v389, 0.6931472
    %v391 = vlog2.pop %v384
    %v392 = vmul.f32 %v391, 0.6931472
    %v393 = vadd.f32 %v358, %v386
    %v394 = vadd.f32 %v360, %v388
    %v395 = vadd.f32 %v362, %v390
    %v396 = vadd.f32 %v364, %v392
    %v397 = vsel %vm93, %v393, 0.0
    %v398 = vsel %vm94, %v394, 0.0
    %v399 = vsel %vm93, %v395, 0.0
    %v400 = vsel %vm94, %v396, 0.0
    %v401 = vsub.f32 %v353, %v397
    %v402 = vsub.f32 %v354, %v398
    %v403 = vsub.f32 %v355, %v399
    %v404 = vsub.f32 %v356, %v400
    %v405 = vmax.f32 %v401, %v402
    %v406 = vrot.slane %v405, 4
    %v407 = vmax.f32 %v405, %v406
    %v408 = vrot.slane %v407, 2
    %v409 = vmax.f32 %v407, %v408
    %v410 = vrot.slane %v409, 1
    %v411 = vmax.f32 %v409, %v410
    %v412 = vmax.f32 %v403, %v404
    %v413 = vrot.slane %v412, 4
    %v414 = vmax.f32 %v412, %v413
    %v415 = vrot.slane %v414, 2
    %v416 = vmax.f32 %v414, %v415
    %v417 = vrot.slane %v416, 1
    %v418 = vmax.f32 %v416, %v417
    %v419 = vsub.f32 %v401, %v411
    %v420 = vsub.f32 %v402, %v411
    %v421 = vsub.f32 %v403, %v418
    %v422 = vsub.f32 %v404, %v418
    %v423 = vmul.f32 %v419, 1.442695
    %v424 = vpow.pop %v423
    %v425 = vmul.f32 %v420, 1.442695
    %v426 = vpow.pop %v425
    %v427 = vmul.f32 %v421, 1.442695
    %v428 = vpow.pop %v427
    %v429 = vmul.f32 %v422, 1.442695
    %v430 = vpow.pop %v429
    %v431 = vadd.f32 %v424, %v426
    %v432 = vrot.slane %v431, 4
    %v433 = vadd.f32 %v431, %v432
    %v434 = vrot.slane %v433, 2
    %v435 = vadd.f32 %v433, %v434
    %v436 = vrot.slane %v435, 1
    %v437 = vadd.f32 %v435, %v436
    %v438 = vadd.f32 %v428, %v430
    %v439 = vrot.slane %v438, 4
    %v440 = vadd.f32 %v438, %v439
    %v441 = vrot.slane %v440, 2
    %v442 = vadd.f32 %v440, %v441
    %v443 = vrot.slane %v442, 1
    %v444 = vadd.f32 %v442, %v443
    %v445 = vlog2.pop %v437
    %v446 = vmul.f32 %v445, 0.6931472
    %v447 = vlog2.pop %v444
    %v448 = vmul.f32 %v447, 0.6931472
    %v449 = vadd.f32 %v411, %v446
    %v450 = vadd.f32 %v418, %v448
    %v451 = vsel %vm150, %v449, 0.0
    %v452 = vsel %vm150, %v450, 0.0
    %v453 = vsub.f32 %v401, %v451
    %v454 = vsub.f32 %v402, %v451
    %v455 = vsub.f32 %v403, %v452
    %v456 = vsub.f32 %v404, %v452
    %457 = vmax.xlane.f32.xlu0 %v453
    %v458 = vpop.xlane.xlu0 %457
    %459 = vmax.xlane.f32.xlu0 %v454
    %v460 = vpop.xlane.xlu0 %459
    %461 = vmax.xlane.f32.xlu0 %v455
    %v462 = vpop.xlane.xlu0 %461
    %463 = vmax.xlane.f32.xlu0 %v456
    %v464 = vpop.xlane.xlu0 %463
    %v465 = vsub.f32 %v453, %v458
    %v466 = vsub.f32 %v454, %v460
    %v467 = vsub.f32 %v455, %v462
    %v468 = vsub.f32 %v456, %v464
    %v469 = vmul.f32 %v465, 1.442695
    %v470 = vpow.pop %v469
    %v471 = vmul.f32 %v466, 1.442695
    %v472 = vpow.pop %v471
    %v473 = vmul.f32 %v467, 1.442695
    %v474 = vpow.pop %v473
    %v475 = vmul.f32 %v468, 1.442695
    %v476 = vpow.pop %v475
    %477 = vadd.xlane.f32.xlu0 %v470
    %v478 = vpop.xlane.xlu0 %477
    %479 = vadd.xlane.f32.xlu0 %v472
    %v480 = vpop.xlane.xlu0 %479
    %481 = vadd.xlane.f32.xlu0 %v474
    %v482 = vpop.xlane.xlu0 %481
    %483 = vadd.xlane.f32.xlu0 %v476
    %v484 = vpop.xlane.xlu0 %483
    %v485 = vlog2.pop %v478
    %v486 = vmul.f32 %v485, 0.6931472
    %v487 = vlog2.pop %v480
    %v488 = vmul.f32 %v487, 0.6931472
    %v489 = vlog2.pop %v482
    %v490 = vmul.f32 %v489, 0.6931472
    %v491 = vlog2.pop %v484
    %v492 = vmul.f32 %v491, 0.6931472
    %v493 = vadd.f32 %v458, %v486
    %v494 = vadd.f32 %v460, %v488
    %v495 = vadd.f32 %v462, %v490
    %v496 = vadd.f32 %v464, %v492
    %v497 = vsel %vm93, %v493, 0.0
    %v498 = vsel %vm94, %v494, 0.0
    %v499 = vsel %vm93, %v495, 0.0
    %v500 = vsel %vm94, %v496, 0.0
    %v501 = vsub.f32 %v453, %v497
    %v502 = vsub.f32 %v454, %v498
    %v503 = vsub.f32 %v455, %v499
    %v504 = vsub.f32 %v456, %v500
    %v505 = vmax.f32 %v501, %v502
    %v506 = vrot.slane %v505, 4
    %v507 = vmax.f32 %v505, %v506
    %v508 = vrot.slane %v507, 2
    %v509 = vmax.f32 %v507, %v508
    %v510 = vrot.slane %v509, 1
    %v511 = vmax.f32 %v509, %v510
    %v512 = vmax.f32 %v503, %v504
    %v513 = vrot.slane %v512, 4
    %v514 = vmax.f32 %v512, %v513
    %v515 = vrot.slane %v514, 2
    %v516 = vmax.f32 %v514, %v515
    %v517 = vrot.slane %v516, 1
    %v518 = vmax.f32 %v516, %v517
    %v519 = vsub.f32 %v501, %v511
    %v520 = vsub.f32 %v502, %v511
    %v521 = vsub.f32 %v503, %v518
    %v522 = vsub.f32 %v504, %v518
    %v523 = vmul.f32 %v519, 1.442695
    %v524 = vpow.pop %v523
    %v525 = vmul.f32 %v520, 1.442695
    %v526 = vpow.pop %v525
    %v527 = vmul.f32 %v521, 1.442695
    %v528 = vpow.pop %v527
    %v529 = vmul.f32 %v522, 1.442695
    %v530 = vpow.pop %v529
    %v531 = vadd.f32 %v524, %v526
    %v532 = vrot.slane %v531, 4
    %v533 = vadd.f32 %v531, %v532
    %v534 = vrot.slane %v533, 2
    %v535 = vadd.f32 %v533, %v534
    %v536 = vrot.slane %v535, 1
    %v537 = vadd.f32 %v535, %v536
    %v538 = vadd.f32 %v528, %v530
    %v539 = vrot.slane %v538, 4
    %v540 = vadd.f32 %v538, %v539
    %v541 = vrot.slane %v540, 2
    %v542 = vadd.f32 %v540, %v541
    %v543 = vrot.slane %v542, 1
    %v544 = vadd.f32 %v542, %v543
    %v545 = vlog2.pop %v537
    %v546 = vmul.f32 %v545, 0.6931472
    %v547 = vlog2.pop %v544
    %v548 = vmul.f32 %v547, 0.6931472
    %v549 = vadd.f32 %v511, %v546
    %v550 = vadd.f32 %v518, %v548
    %v551 = vsel %vm150, %v549, 0.0
    %v552 = vsel %vm150, %v550, 0.0
    %v553 = vsub.f32 %v501, %v551
    %v554 = vsub.f32 %v502, %v551
    %v555 = vsub.f32 %v503, %v552
    %v556 = vsub.f32 %v504, %v552
    %557 = vst [vmem:[#allocation2] sm:$0xff] %v553
    %558 = vst [vmem:[#allocation2 + $0x8] sm:$0xff] %v554
    %559 = vst [vmem:[#allocation2 + $0x10] sm:$0xff] %v555
    %560 = vst [vmem:[#allocation2 + $0x18] sm:$0xff] %v556
    %v561 = vld [vmem:[#allocation2] sm:$0xff]
    %v562 = vld [vmem:[#allocation2 + $0x10] sm:$0xff]
    %563 = vst.msk [vmem:[#allocation6] sm:$0xff] %vm41, %v561
    %564 = vst.msk [vmem:[#allocation6 + $0x8] sm:$0xff] %vm41, %v562
    // Predicated region
    $region10: #{tpu_custom_call.1} parent=1 // pred_check
      _
    $region11: #{tpu_custom_call.1} parent=1 // pred_check_branch
      %566 = sbr.rel (0) target = $region13
    $region12: #{tpu_custom_call.1} parent=1 // pred_region
      %s568 = ssub.s32 256, 256
      %569 = vsyncadd [#allocation5], %s568
      %s570 = sshll.u32 [#allocation6], 4
      %s571 = int_to_ptr.vmem [resolvable:$true] %s570
      %576 = dma.vmem_to_hbm [thread:$0]  %s571, 256, %s1, [#allocation5], 128, 128, 8
    $region13: #{tpu_custom_call.1} parent=1 // pred_fallthru
      _
    // Predicated region
    $region14: #{tpu_custom_call.1} parent=1 // pred_check
      _
    $region15: #{tpu_custom_call.1} parent=1 // pred_check_branch
      %578 = sbr.rel (0) target = $region17
    $region16: #{tpu_custom_call.1} parent=1 // pred_region
      %579 = dma.done [#allocation5], 256
    $region17: #{tpu_custom_call.1} parent=1 // pred_fallthru
      _
    %580 = vsyncpa [#allocation4], 1
    %581 = vsyncpa [#allocation5], 1

</llo_original>
